<compile_context>
chip_gen: v7x
topology: tpu7x:2x2x1
jax: 0.10.0
libtpu: 0.0.40
codegen_flags: <defaults>
</compile_context>

<pallas_src>
import functools

import jax
import jax.numpy as jnp
import numpy as np
from jax.experimental import pallas as pl
from jax.experimental.pallas import tpu as pltpu


def _band_weights(w_hwio, width):
    """Fold the 3 horizontal taps + channel contraction of a 3x3 'same' conv into
    a block-banded matrix for the lane-dense (rows = H, lanes = W*C) layout.

    w_hwio: (3, 3, Cin, Cout)  ->  (3*W*Cin, W*Cout)
      row index    = dh * (W*Cin) + wp * Cin + cin      (dh = vertical tap)
      column index = w * Cout + cout
      entry        = w_hwio[dh, wp - w + 1, cin, cout]  if |wp - w| <= 1 else 0
    """
    kh, kw, cin, cout = w_hwio.shape
    ind = np.zeros((kw, width, width), np.float32)
    for dw in range(kw):
        for w in range(width):
            wp = w + dw - 1
            if 0 <= wp < width:
                ind[dw, wp, w] = 1.0
    ind = jnp.asarray(ind)
    # band[dh, wp, cin, w, cout] = sum_dw ind[dw, wp, w] * w_hwio[dh, dw, cin, cout]
    band = jnp.einsum('dpw,edco->epcwo', ind, w_hwio.astype(jnp.float32))
    return band.reshape(kh * width * cin, width * cout)


def _residual5_kernel(x_ref, w1_ref, w2_ref, b1_ref, b2_ref, o_ref, *, H, WC):
    """One batch element per grid step.

    x_ref  : (1, H, WC)   lane-dense activations (WC = W*C)
    w*_ref : (3*WC, WC)   banded conv weights with BN scale folded in
    b*_ref : (1, WC)      folded BN bias, tiled across W
    o_ref  : (1, H, WC)
    """
    x = x_ref[0]                                        # (H, WC) f32

    # Stacked 0/1 shift matrix (2H, H):
    #   rows [0, H):  row h selects a[h-1]  (zero row at the top border)
    #   rows [H, 2H): row H+h selects a[h+1] (zero row at the bottom border)
    ii = jax.lax.broadcasted_iota(jnp.int32, (2 * H, H), 0)
    jj = jax.lax.broadcasted_iota(jnp.int32, (2 * H, H), 1)
    sel = jnp.where(ii < H, ii - 1, ii - H + 1)
    shifts = (jj == sel).astype(jnp.float32)

    def conv3x3(a, wband):
        ud = jnp.dot(shifts, a, preferred_element_type=jnp.float32)   # (2H, WC)
        k = jnp.concatenate([ud[:H], a, ud[H:]], axis=1)              # (H, 3*WC)
        return jnp.dot(k, wband, preferred_element_type=jnp.float32)

    # conv1 (BN1 scale folded into w1) -> +bias1 -> relu
    y = jnp.maximum(conv3x3(x, w1_ref[...]) + b1_ref[...], 0.0)

    # conv2 (BN2 scale folded into w2) -> +bias2 -> residual add -> relu
    y2 = conv3x3(y, w2_ref[...]) + b2_ref[...]
    o_ref[0] = jnp.maximum(x + y2, 0.0).astype(o_ref.dtype)


def residual5_pallas(x_nchw, w1_hwio, w2_hwio, scale1, bias1, scale2, bias2):
    """x_nchw: (B, C, H, W) float32. Conv weights in HWIO. Returns (B, C, H, W)."""
    B, C, H, W = x_nchw.shape
    WC = W * C

    # Lane-dense layout (B, H, W*C); W*C == 128 at the test shape.
    x = jnp.transpose(x_nchw, (0, 2, 3, 1)).reshape(B, H, WC).astype(jnp.float32)

    # Folded BN scale/bias tiled across W (lane index = w*C + c).
    s1 = jnp.tile(scale1.astype(jnp.float32), W).reshape(1, WC)
    b1 = jnp.tile(bias1.astype(jnp.float32), W).reshape(1, WC)
    s2 = jnp.tile(scale2.astype(jnp.float32), W).reshape(1, WC)
    b2 = jnp.tile(bias2.astype(jnp.float32), W).reshape(1, WC)

    # Banded conv weights with the BN scale folded into the output columns.
    wb1 = _band_weights(w1_hwio, W) * s1          # (3*WC, WC)
    wb2 = _band_weights(w2_hwio, W) * s2          # (3*WC, WC)

    kernel = functools.partial(_residual5_kernel, H=H, WC=WC)

    out = pl.pallas_call(
        kernel,
        out_shape=jax.ShapeDtypeStruct((B, H, WC), jnp.float32),
        grid_spec=pltpu.PrefetchScalarGridSpec(
            num_scalar_prefetch=0,
            grid=(B,),
            in_specs=[
                pl.BlockSpec((1, H, WC), lambda b: (b, 0, 0)),
                pl.BlockSpec((3 * WC, WC), lambda b: (0, 0)),
                pl.BlockSpec((3 * WC, WC), lambda b: (0, 0)),
                pl.BlockSpec((1, WC), lambda b: (0, 0)),
                pl.BlockSpec((1, WC), lambda b: (0, 0)),
            ],
            out_specs=pl.BlockSpec((1, H, WC), lambda b: (b, 0, 0)),
        ),
        compiler_params=pltpu.CompilerParams(
            dimension_semantics=("parallel",)),
    )(x, wb1, wb2, b1, b2)

    out = out.reshape(B, H, W, C)
    return jnp.transpose(out, (0, 3, 1, 2))              # back to NCHW


def residual5_reference(x_nchw, w1_hwio, w2_hwio, scale1, bias1, scale2, bias2):
    """Pure-JAX reference (lax conv) for correctness checking."""
    x = jnp.transpose(x_nchw, (0, 2, 3, 1))
    dn = ("NHWC", "HWIO", "NHWC")
    y = jax.lax.conv_general_dilated(x, w1_hwio, (1, 1), "SAME",
                                     dimension_numbers=dn)
    y = y * scale1 + bias1
    y = jnp.maximum(y, 0.0)
    y = jax.lax.conv_general_dilated(y, w2_hwio, (1, 1), "SAME",
                                     dimension_numbers=dn)
    y = y * scale2 + bias2
    out = jnp.maximum(x + y, 0.0)
    return jnp.transpose(out, (0, 3, 1, 2))


if __name__ == "__main__":
    B, C, H, W = 2, 8, 16, 16          # Residual5(input=8, output=8); W*C = 128
    key = jax.random.PRNGKey(0)
    kx, kw1, kw2, kg1, kb1, km1, kv1, kg2, kb2, km2, kv2 = jax.random.split(key, 11)

    x = jax.random.normal(kx, (B, C, H, W), jnp.float32)

    # Conv weights (PyTorch stores OIHW; built directly in HWIO here).
    w1 = jax.random.normal(kw1, (3, 3, C, C), jnp.float32) * 0.1
    w2 = jax.random.normal(kw2, (3, 3, C, C), jnp.float32) * 0.1

    # BatchNorm parameters, folded to scale/bias (eval mode).
    eps = 1e-5
    gamma1 = 1.0 + 0.1 * jax.random.normal(kg1, (C,), jnp.float32)
    beta1 = 0.1 * jax.random.normal(kb1, (C,), jnp.float32)
    mean1 = 0.1 * jax.random.normal(km1, (C,), jnp.float32)
    var1 = jnp.abs(1.0 + 0.1 * jax.random.normal(kv1, (C,), jnp.float32))
    gamma2 = 1.0 + 0.1 * jax.random.normal(kg2, (C,), jnp.float32)
    beta2 = 0.1 * jax.random.normal(kb2, (C,), jnp.float32)
    mean2 = 0.1 * jax.random.normal(km2, (C,), jnp.float32)
    var2 = jnp.abs(1.0 + 0.1 * jax.random.normal(kv2, (C,), jnp.float32))

    scale1 = gamma1 / jnp.sqrt(var1 + eps)
    bias1 = beta1 - mean1 * scale1
    scale2 = gamma2 / jnp.sqrt(var2 + eps)
    bias2 = beta2 - mean2 * scale2

    out = residual5_pallas(x, w1, w2, scale1, bias1, scale2, bias2)
    out = jax.block_until_ready(out)

    ref = residual5_reference(x, w1, w2, scale1, bias1, scale2, bias2)
    np.testing.assert_allclose(np.asarray(out), np.asarray(ref),
                               rtol=1e-3, atol=1e-3)
    print("KERNEL_OK")
</pallas_src>

<mosaic_0001>
module attributes {stable_mosaic.version = 11 : i64} {
  func.func @_residual5_kernel(%arg0: i32, %arg1: memref<1x16x128xf32, #tpu.memory_space<vmem>>, %arg2: memref<384x128xf32, #tpu.memory_space<vmem>>, %arg3: memref<384x128xf32, #tpu.memory_space<vmem>>, %arg4: memref<1x128xf32, #tpu.memory_space<vmem>>, %arg5: memref<1x128xf32, #tpu.memory_space<vmem>>, %arg6: memref<1x16x128xf32, #tpu.memory_space<vmem>>) attributes {dimension_semantics = [#tpu.dimension_semantics<parallel>], iteration_bounds = array<i64: 2>, scalar_prefetch = 0 : i64, scratch_operands = 0 : i64, tpu.core_type = #tpu.core_type<tc>, window_params = [{transform_indices = @transform_0, window_bounds = array<i64: 1, 16, 128>}, {pipeline_mode = #tpu.pipeline_mode<synchronous>, transform_indices = @transform_1, window_bounds = array<i64: 384, 128>}, {pipeline_mode = #tpu.pipeline_mode<synchronous>, transform_indices = @transform_2, window_bounds = array<i64: 384, 128>}, {pipeline_mode = #tpu.pipeline_mode<synchronous>, transform_indices = @transform_3, window_bounds = array<i64: 1, 128>}, {pipeline_mode = #tpu.pipeline_mode<synchronous>, transform_indices = @transform_4, window_bounds = array<i64: 1, 128>}, {transform_indices = @transform_5, window_bounds = array<i64: 1, 16, 128>}]} {
    %c0 = arith.constant 0 : index
    %c0_0 = arith.constant 0 : index
    %c0_1 = arith.constant 0 : index
    %0 = vector.load %arg1[%c0, %c0_0, %c0_1] : memref<1x16x128xf32, #tpu.memory_space<vmem>>, vector<1x16x128xf32>
    %1 = vector.shape_cast %0 : vector<1x16x128xf32> to vector<16x128xf32>
    %2 = tpu.iota {dimensions = array<i32: 0>} : vector<32x16xi32>
    %3 = tpu.iota {dimensions = array<i32: 1>} : vector<32x16xi32>
    %c16_i32 = arith.constant 16 : i32
    %4 = vector.broadcast %c16_i32 : i32 to vector<32x16xi32>
    %5 = arith.cmpi slt, %2, %4 : vector<32x16xi32>
    %c1_i32 = arith.constant 1 : i32
    %6 = vector.broadcast %c1_i32 : i32 to vector<32x16xi32>
    %7 = arith.subi %2, %6 : vector<32x16xi32>
    %c16_i32_2 = arith.constant 16 : i32
    %8 = vector.broadcast %c16_i32_2 : i32 to vector<32x16xi32>
    %9 = arith.subi %2, %8 : vector<32x16xi32>
    %c1_i32_3 = arith.constant 1 : i32
    %10 = vector.broadcast %c1_i32_3 : i32 to vector<32x16xi32>
    %11 = arith.addi %9, %10 : vector<32x16xi32>
    %12 = arith.select %5, %7, %11 : vector<32x16xi1>, vector<32x16xi32>
    %13 = arith.cmpi eq, %3, %12 : vector<32x16xi32>
    %14 = arith.extui %13 : vector<32x16xi1> to vector<32x16xi32>
    %15 = arith.sitofp %14 : vector<32x16xi32> to vector<32x16xf32>
    %c0_4 = arith.constant 0 : index
    %c0_5 = arith.constant 0 : index
    %16 = vector.load %arg2[%c0_4, %c0_5] : memref<384x128xf32, #tpu.memory_space<vmem>>, vector<384x128xf32>
    %cst = arith.constant dense<0.000000e+00> : vector<32x128xf32>
    %17 = tpu.matmul %15, %1, %cst {dimension_numbers = #tpu.dot_dimension_numbers<[1], [0], [0], [1], [0, 0, 1, 1], [], []>} : vector<32x16xf32>, vector<16x128xf32>, vector<32x128xf32> -> vector<32x128xf32>
    %18 = vector.extract_strided_slice %17 {offsets = [0, 0], sizes = [16, 128], strides = [1, 1]} : vector<32x128xf32> to vector<16x128xf32>
    %19 = vector.extract_strided_slice %17 {offsets = [16, 0], sizes = [16, 128], strides = [1, 1]} : vector<32x128xf32> to vector<16x128xf32>
    %20 = tpu.concatenate %18, %1, %19 in 1 : vector<16x128xf32>, vector<16x128xf32>, vector<16x128xf32> -> vector<16x384xf32>
    %cst_6 = arith.constant dense<0.000000e+00> : vector<16x128xf32>
    %21 = tpu.matmul %20, %16, %cst_6 {dimension_numbers = #tpu.dot_dimension_numbers<[1], [0], [0], [1], [0, 0, 1, 1], [], []>} : vector<16x384xf32>, vector<384x128xf32>, vector<16x128xf32> -> vector<16x128xf32>
    %c0_7 = arith.constant 0 : index
    %c0_8 = arith.constant 0 : index
    %22 = vector.load %arg4[%c0_7, %c0_8] : memref<1x128xf32, #tpu.memory_space<vmem>>, vector<1x128xf32>
    %23 = vector.broadcast %22 : vector<1x128xf32> to vector<16x128xf32>
    %24 = arith.addf %21, %23 : vector<16x128xf32>
    %cst_9 = arith.constant 0.000000e+00 : f32
    %25 = vector.broadcast %cst_9 : f32 to vector<16x128xf32>
    %26 = arith.maximumf %24, %25 : vector<16x128xf32>
    %c0_10 = arith.constant 0 : index
    %c0_11 = arith.constant 0 : index
    %27 = vector.load %arg3[%c0_10, %c0_11] : memref<384x128xf32, #tpu.memory_space<vmem>>, vector<384x128xf32>
    %cst_12 = arith.constant dense<0.000000e+00> : vector<32x128xf32>
    %28 = tpu.matmul %15, %26, %cst_12 {dimension_numbers = #tpu.dot_dimension_numbers<[1], [0], [0], [1], [0, 0, 1, 1], [], []>} : vector<32x16xf32>, vector<16x128xf32>, vector<32x128xf32> -> vector<32x128xf32>
    %29 = vector.extract_strided_slice %28 {offsets = [0, 0], sizes = [16, 128], strides = [1, 1]} : vector<32x128xf32> to vector<16x128xf32>
    %30 = vector.extract_strided_slice %28 {offsets = [16, 0], sizes = [16, 128], strides = [1, 1]} : vector<32x128xf32> to vector<16x128xf32>
    %31 = tpu.concatenate %29, %26, %30 in 1 : vector<16x128xf32>, vector<16x128xf32>, vector<16x128xf32> -> vector<16x384xf32>
    %cst_13 = arith.constant dense<0.000000e+00> : vector<16x128xf32>
    %32 = tpu.matmul %31, %27, %cst_13 {dimension_numbers = #tpu.dot_dimension_numbers<[1], [0], [0], [1], [0, 0, 1, 1], [], []>} : vector<16x384xf32>, vector<384x128xf32>, vector<16x128xf32> -> vector<16x128xf32>
    %c0_14 = arith.constant 0 : index
    %c0_15 = arith.constant 0 : index
    %33 = vector.load %arg5[%c0_14, %c0_15] : memref<1x128xf32, #tpu.memory_space<vmem>>, vector<1x128xf32>
    %34 = vector.broadcast %33 : vector<1x128xf32> to vector<16x128xf32>
    %35 = arith.addf %32, %34 : vector<16x128xf32>
    %36 = arith.addf %1, %35 : vector<16x128xf32>
    %cst_16 = arith.constant 0.000000e+00 : f32
    %37 = vector.broadcast %cst_16 : f32 to vector<16x128xf32>
    %38 = arith.maximumf %36, %37 : vector<16x128xf32>
    %c0_17 = arith.constant 0 : index
    %c0_18 = arith.constant 0 : index
    %c0_19 = arith.constant 0 : index
    %39 = vector.load %arg6[%c0_17, %c0_18, %c0_19] : memref<1x16x128xf32, #tpu.memory_space<vmem>>, vector<1x16x128xf32>
    %40 = vector.shape_cast %39 : vector<1x16x128xf32> to vector<16x128xf32>
    %41 = vector.shape_cast %38 : vector<16x128xf32> to vector<1x16x128xf32>
    tpu.vector_store %arg6[%c0_17, %c0_18, %c0_19], %41 {strides = array<i32>} : memref<1x16x128xf32, #tpu.memory_space<vmem>>, vector<1x16x128xf32>,
    return
  }
  func.func @transform_0(%arg0: i32) -> (i32, i32, i32) {
    %c0_i32 = arith.constant 0 : i32
    %c0_i32_0 = arith.constant 0 : i32
    %c0_i32_1 = arith.constant 0 : i32
    return %arg0, %c0_i32, %c0_i32_0 : i32, i32, i32
  }
  func.func @transform_1(%arg0: i32) -> (i32, i32) {
    %c0_i32 = arith.constant 0 : i32
    %c0_i32_0 = arith.constant 0 : i32
    %c0_i32_1 = arith.constant 0 : i32
    return %c0_i32, %c0_i32_0 : i32, i32
  }
  func.func @transform_2(%arg0: i32) -> (i32, i32) {
    %c0_i32 = arith.constant 0 : i32
    %c0_i32_0 = arith.constant 0 : i32
    %c0_i32_1 = arith.constant 0 : i32
    return %c0_i32, %c0_i32_0 : i32, i32
  }
  func.func @transform_3(%arg0: i32) -> (i32, i32) {
    %c0_i32 = arith.constant 0 : i32
    %c0_i32_0 = arith.constant 0 : i32
    %c0_i32_1 = arith.constant 0 : i32
    return %c0_i32, %c0_i32_0 : i32, i32
  }
  func.func @transform_4(%arg0: i32) -> (i32, i32) {
    %c0_i32 = arith.constant 0 : i32
    %c0_i32_0 = arith.constant 0 : i32
    %c0_i32_1 = arith.constant 0 : i32
    return %c0_i32, %c0_i32_0 : i32, i32
  }
  func.func @transform_5(%arg0: i32) -> (i32, i32, i32) {
    %c0_i32 = arith.constant 0 : i32
    %c0_i32_0 = arith.constant 0 : i32
    %c0_i32_1 = arith.constant 0 : i32
    return %arg0, %c0_i32, %c0_i32_0 : i32, i32, i32
  }
}

</mosaic_0001>

<llo_original>
// kernel: tpu_custom_call.1
$region0: #{tpu_custom_call.1}
  #allocation0 [shape = 'u32[]', space=smem, size = 0x4, offset = 0x4, fixed_abs, tag = 'smem constant byte address 0x4 - core index']
  #allocation1 [shape = 'u32[144,128]{1,0:T(1,128)}', space=vmem, size = 0x12000, scoped, tag = 'internal scratch']
  %s0 = inlined_call_operand.hbm [shape: f32[2,16,128], index: 0, kind: input, shape index: {}]
  %s1 = inlined_call_operand.hbm [shape: f32[384,128], index: 1, kind: input, shape index: {}]
  %s2 = inlined_call_operand.hbm [shape: f32[384,128], index: 2, kind: input, shape index: {}]
  %s3 = inlined_call_operand.vmem [shape: f32[1,128], index: 3, kind: input, shape index: {}]
  %s4 = inlined_call_operand.vmem [shape: f32[1,128], index: 4, kind: input, shape index: {}]
  %s5 = inlined_call_operand.hbm [shape: f32[2,16,128], index: 5, kind: output, shape index: {}]
  %s6 = sld [smem:[#allocation0]]
  $region65: #{tpu_custom_call.1} parent=0
    _
  %s8 = ssub.s32 1, %s6
  %s9 = scalar_select 0, %s8, %s6
  $region1: #{tpu_custom_call.1} parent=0
    #allocation2 [shape = 'u8[16384]{0}', space=vmem, size = 0x4000, scoped, tag = 'input window, operand 0']
    #allocation3 [shape = 's32[2]{0}', space=sflag, size = 0x8, scoped, tag = 'scoped memory for tpu_custom_call.1']
    #allocation4 [shape = 's32[2]{0}', space=sflag, size = 0x8, scoped, tag = 'scoped memory for tpu_custom_call.1']
    #allocation5 [shape = 'u8[196608]{0}', space=vmem, size = 0x30000, scoped, tag = 'input window, operand 1, single buffered']
    #allocation6 [shape = 's32[1]{0}', space=sflag, size = 0x4, scoped, tag = 'scoped memory for tpu_custom_call.1']
    #allocation7 [shape = 'u8[196608]{0}', space=vmem, size = 0x30000, scoped, tag = 'input window, operand 2, single buffered']
    #allocation8 [shape = 'u8[16384]{0}', space=vmem, size = 0x4000, scoped, tag = 'output window, operand 0']
    %10 = vsyncpa [#allocation3], 0
    %s11 = scalar_lea.sflag [#allocation3], 1
    %12 = vsyncpa %s11, 0
    %13 = vsyncpa [#allocation6], 0
    %14 = vsyncpa [#allocation4], 0
    %s15 = scalar_lea.sflag [#allocation4], 1
    %16 = vsyncpa %s15, 0
    loop: start=0, step=1, limit=4
    $region2: #{tpu_custom_call.1} parent=1 // loop_pre_header
      _
    $region3: #{tpu_custom_call.1} parent=1 // loop_header
      %s18 = sphi 0, %s22
      %p19 = scmp.ge.s32.totalorder %s18, 4
      %s28 = sphi 0, %s30
      %s31 = sphi 0, %s28
      %s32 = sphi 0, %s31
      %s48 = sphi 0, %s32
      %s52 = sphi 0, %s52
      %s54 = sphi 0, %s52
      %s55 = sphi 0, %s54
      %s69 = sphi 0, %s55
      %s73 = sphi 0, %s73
      %s75 = sphi 0, %s73
      %s76 = sphi 0, %s75
      %s90 = sphi 0, %s76
      %s94 = sphi 0, %s94
      %s96 = sphi 0, %s94
      %s97 = sphi 0, %s96
      %s111 = sphi 0, %s97
      %s115 = sphi 0, %s115
      %s117 = sphi 0, %s115
      %s118 = sphi 0, %s117
      %s132 = sphi 0, %s118
      %s138 = sphi 0, %s140
      %s141 = sphi 0, %s138
      %s142 = sphi 0, %s141
      %s158 = sphi 0, %s142
    $region4: #{tpu_custom_call.1} parent=1 // loop_header_branch
      %21 = sbr.rel (%p19) target = $region8
    $region5: #{tpu_custom_call.1} parent=1 // loop_body
      %s23 = ssub.s32 %s18, 1
      %s24 = ssub.s32 %s18, 2
      %s25 = sadd.s32 %s18, 1
      %s26 = ssub.s32 %s18, %s25
      %p27 = scmp.eq.s32.totalorder %s26, 0
      %s29 = sadd.s32 %s28, 1
      %s30 = scalar_select %p27, %s28, %s29
      %p33 = pneg %p27
      %p34 = scmp.eq.s32.totalorder %s18, 1
      %p35 = por %p33, %p34
      %p36 = scmp.ne.s32.totalorder %s28, %s31
      %p37 = scmp.eq.s32.totalorder %s18, 0
      %p38 = por %p36, %p37
      %p39 = scmp.ne.s32.totalorder %s28, %s31
      %p40 = scmp.eq.s32.totalorder %s23, 1
      %p41 = por %p39, %p40
      %p42 = scmp.ne.s32.totalorder %s31, %s32
      %p43 = scmp.eq.s32.totalorder %s23, 0
      %p44 = por %p42, %p43
      %p45 = scmp.ne.s32.totalorder %s31, %s32
      %p46 = scmp.eq.s32.totalorder %s24, 1
      %p47 = por %p45, %p46
      %p49 = scmp.ne.s32.totalorder %s32, %s48
      %p50 = scmp.eq.s32.totalorder %s24, 0
      %p51 = por %p49, %p50
      %s53 = sadd.s32 %s52, 1
      %p56 = scmp.eq.s32.totalorder %s18, 1
      %p57 = scmp.ne.s32.totalorder %s52, %s54
      %p58 = scmp.eq.s32.totalorder %s18, 0
      %p59 = por %p57, %p58
      %p60 = scmp.ne.s32.totalorder %s52, %s54
      %p61 = scmp.eq.s32.totalorder %s23, 1
      %p62 = por %p60, %p61
      %p63 = scmp.ne.s32.totalorder %s54, %s55
      %p64 = scmp.eq.s32.totalorder %s23, 0
      %p65 = por %p63, %p64
      %p66 = scmp.ne.s32.totalorder %s54, %s55
      %p67 = scmp.eq.s32.totalorder %s24, 1
      %p68 = por %p66, %p67
      %p70 = scmp.ne.s32.totalorder %s55, %s69
      %p71 = scmp.eq.s32.totalorder %s24, 0
      %p72 = por %p70, %p71
      %s74 = sadd.s32 %s73, 1
      %p77 = scmp.eq.s32.totalorder %s18, 1
      %p78 = scmp.ne.s32.totalorder %s73, %s75
      %p79 = scmp.eq.s32.totalorder %s18, 0
      %p80 = por %p78, %p79
      %p81 = scmp.ne.s32.totalorder %s73, %s75
      %p82 = scmp.eq.s32.totalorder %s23, 1
      %p83 = por %p81, %p82
      %p84 = scmp.ne.s32.totalorder %s75, %s76
      %p85 = scmp.eq.s32.totalorder %s23, 0
      %p86 = por %p84, %p85
      %p87 = scmp.ne.s32.totalorder %s75, %s76
      %p88 = scmp.eq.s32.totalorder %s24, 1
      %p89 = por %p87, %p88
      %p91 = scmp.ne.s32.totalorder %s76, %s90
      %p92 = scmp.eq.s32.totalorder %s24, 0
      %p93 = por %p91, %p92
      %s95 = sadd.s32 %s94, 1
      %p98 = scmp.eq.s32.totalorder %s18, 1
      %p99 = scmp.ne.s32.totalorder %s94, %s96
      %p100 = scmp.eq.s32.totalorder %s18, 0
      %p101 = por %p99, %p100
      %p102 = scmp.ne.s32.totalorder %s94, %s96
      %p103 = scmp.eq.s32.totalorder %s23, 1
      %p104 = por %p102, %p103
      %p105 = scmp.ne.s32.totalorder %s96, %s97
      %p106 = scmp.eq.s32.totalorder %s23, 0
      %p107 = por %p105, %p106
      %p108 = scmp.ne.s32.totalorder %s96, %s97
      %p109 = scmp.eq.s32.totalorder %s24, 1
      %p110 = por %p108, %p109
      %p112 = scmp.ne.s32.totalorder %s97, %s111
      %p113 = scmp.eq.s32.totalorder %s24, 0
      %p114 = por %p112, %p113
      %s116 = sadd.s32 %s115, 1
      %p119 = scmp.eq.s32.totalorder %s18, 1
      %p120 = scmp.ne.s32.totalorder %s115, %s117
      %p121 = scmp.eq.s32.totalorder %s18, 0
      %p122 = por %p120, %p121
      %p123 = scmp.ne.s32.totalorder %s115, %s117
      %p124 = scmp.eq.s32.totalorder %s23, 1
      %p125 = por %p123, %p124
      %p126 = scmp.ne.s32.totalorder %s117, %s118
      %p127 = scmp.eq.s32.totalorder %s23, 0
      %p128 = por %p126, %p127
      %p129 = scmp.ne.s32.totalorder %s117, %s118
      %p130 = scmp.eq.s32.totalorder %s24, 1
      %p131 = por %p129, %p130
      %p133 = scmp.ne.s32.totalorder %s118, %s132
      %p134 = scmp.eq.s32.totalorder %s24, 0
      %p135 = por %p133, %p134
      %s136 = ssub.s32 %s18, %s25
      %p137 = scmp.eq.s32.totalorder %s136, 0
      %s139 = sadd.s32 %s138, 1
      %s140 = scalar_select %p137, %s138, %s139
      %p143 = pneg %p137
      %p144 = scmp.eq.s32.totalorder %s18, 1
      %p145 = por %p143, %p144
      %p146 = scmp.ne.s32.totalorder %s138, %s141
      %p147 = scmp.eq.s32.totalorder %s18, 0
      %p148 = por %p146, %p147
      %p149 = scmp.ne.s32.totalorder %s138, %s141
      %p150 = scmp.eq.s32.totalorder %s23, 1
      %p151 = por %p149, %p150
      %p152 = scmp.ne.s32.totalorder %s141, %s142
      %p153 = scmp.eq.s32.totalorder %s23, 0
      %p154 = por %p152, %p153
      %p155 = scmp.ne.s32.totalorder %s141, %s142
      %p156 = scmp.eq.s32.totalorder %s24, 1
      %p157 = por %p155, %p156
      %p159 = scmp.ne.s32.totalorder %s142, %s158
      %p160 = scmp.eq.s32.totalorder %s24, 0
      %p161 = por %p159, %p160
      %p162 = scmp.le.s32.totalorder 1, %s18
      %p163 = scmp.lt.s32.totalorder %s18, 3
      %p164 = pnand %p162, %p163
      %p165 = pneg %p164
      // Predicated region
      $region9: #{tpu_custom_call.1} parent=5 // pred_check
        _
      $region10: #{tpu_custom_call.1} parent=5 // pred_check_branch
        %167 = sbr.rel (%p164) target = $region12
      $region11: #{tpu_custom_call.1} parent=5 // pred_region
        %s168 = ssub.s32 %s18, 1
        // Predicated region
        $region13: #{tpu_custom_call.1} parent=11 // pred_check
          %p169 = pneg %p65
        $region14: #{tpu_custom_call.1} parent=11 // pred_check_branch
          %171 = sbr.rel (%p169) target = $region16
        $region15: #{tpu_custom_call.1} parent=11 // pred_region
          %s173 = ssub.s32 6144, 6144
          %174 = vsyncadd [#allocation6], %s173
          %s175 = sshll.u32 [#allocation5], 4
          %s176 = int_to_ptr.vmem [resolvable:$true] %s175
          %181 = dma.hbm_to_vmem [thread:$0]  %s1, 6144, %s176, [#allocation6], 128, 128, 8
        $region16: #{tpu_custom_call.1} parent=11 // pred_fallthru
          _
        // Predicated region
        $region17: #{tpu_custom_call.1} parent=11 // pred_check
          %p182 = pneg %p86
        $region18: #{tpu_custom_call.1} parent=11 // pred_check_branch
          %184 = sbr.rel (%p182) target = $region20
        $region19: #{tpu_custom_call.1} parent=11 // pred_region
          %s186 = ssub.s32 6144, 6144
          %187 = vsyncadd [#allocation6], %s186
          %s188 = sshll.u32 [#allocation7], 4
          %s189 = int_to_ptr.vmem [resolvable:$true] %s188
          %194 = dma.hbm_to_vmem [thread:$0]  %s2, 6144, %s189, [#allocation6], 128, 128, 8
        $region20: #{tpu_custom_call.1} parent=11 // pred_fallthru
          _
        // Predicated region
        $region21: #{tpu_custom_call.1} parent=11 // pred_check
          %p195 = pneg %p107
        $region22: #{tpu_custom_call.1} parent=11 // pred_check_branch
          %197 = sbr.rel (%p195) target = $region24
        $region23: #{tpu_custom_call.1} parent=11 // pred_region
          _
        $region24: #{tpu_custom_call.1} parent=11 // pred_fallthru
          _
        // Predicated region
        $region25: #{tpu_custom_call.1} parent=11 // pred_check
          %p198 = pneg %p128
        $region26: #{tpu_custom_call.1} parent=11 // pred_check_branch
          %200 = sbr.rel (%p198) target = $region28
        $region27: #{tpu_custom_call.1} parent=11 // pred_region
          _
        $region28: #{tpu_custom_call.1} parent=11 // pred_fallthru
          _
      $region12: #{tpu_custom_call.1} parent=5 // pred_fallthru
        _
      %p201 = scmp.lt.s32.totalorder %s18, 2
      // Predicated region
      $region29: #{tpu_custom_call.1} parent=5 // pred_check
        %p202 = pneg %p201
      $region30: #{tpu_custom_call.1} parent=5 // pred_check_branch
        %204 = sbr.rel (%p202) target = $region32
      $region31: #{tpu_custom_call.1} parent=5 // pred_region
        // Predicated region
        $region33: #{tpu_custom_call.1} parent=31 // pred_check
          %p205 = pneg %p38
        $region34: #{tpu_custom_call.1} parent=31 // pred_check_branch
          %207 = sbr.rel (%p205) target = $region36
        $region35: #{tpu_custom_call.1} parent=31 // pred_region
          %s208 = sand.u32 %s28, 1
          %s209 = scalar_lea.sflag [#allocation3], %s208
          %s210 = sand.u32 %s28, 1
          %s211 = smul.addr %s210, 16
          %s212 = scalar_lea.vmem [#allocation2], %s211
          %s214 = ssub.s32 256, 256
          %215 = vsyncadd %s209, %s214
          %s216 = smul.addr %s18, 2
          %s217 = smul.addr %s216, 128
          %s218 = scalar_lea.hbm %s0, %s217
          %s219 = sshll.u32 %s212, 4
          %s220 = int_to_ptr.vmem [resolvable:$true] %s219
          %225 = dma.hbm_to_vmem [thread:$0]  %s218, 256, %s220, %s209, 128, 128, 8
        $region36: #{tpu_custom_call.1} parent=31 // pred_fallthru
          _
      $region32: #{tpu_custom_call.1} parent=5 // pred_fallthru
        _
      %p226 = scmp.le.s32.totalorder 1, %s18
      %p227 = scmp.lt.s32.totalorder %s18, 3
      %p228 = pnand %p226, %p227
      %p229 = pneg %p228
      // Predicated region
      $region37: #{tpu_custom_call.1} parent=5 // pred_check
        _
      $region38: #{tpu_custom_call.1} parent=5 // pred_check_branch
        %231 = sbr.rel (%p228) target = $region40
      $region39: #{tpu_custom_call.1} parent=5 // pred_region
        %s232 = ssub.s32 %s18, 1
        %s233 = sand.u32 %s31, 1
        %s234 = scalar_lea.sflag [#allocation3], %s233
        %s235 = sand.u32 %s31, 1
        %s236 = smul.addr %s235, 16
        %s237 = scalar_lea.vmem [#allocation2], %s236
        // Predicated region
        $region41: #{tpu_custom_call.1} parent=39 // pred_check
          %p238 = pneg %p44
        $region42: #{tpu_custom_call.1} parent=39 // pred_check_branch
          %240 = sbr.rel (%p238) target = $region44
        $region43: #{tpu_custom_call.1} parent=39 // pred_region
          %241 = dma.done %s234, 256
        $region44: #{tpu_custom_call.1} parent=39 // pred_fallthru
          _
        // Predicated region
        $region45: #{tpu_custom_call.1} parent=39 // pred_check
          %p242 = pneg %p65
        $region46: #{tpu_custom_call.1} parent=39 // pred_check_branch
          %244 = sbr.rel (%p242) target = $region48
        $region47: #{tpu_custom_call.1} parent=39 // pred_region
          %245 = dma.done [#allocation6], 6144
        $region48: #{tpu_custom_call.1} parent=39 // pred_fallthru
          _
        // Predicated region
        $region49: #{tpu_custom_call.1} parent=39 // pred_check
          %p246 = pneg %p86
        $region50: #{tpu_custom_call.1} parent=39 // pred_check_branch
          %248 = sbr.rel (%p246) target = $region52
        $region51: #{tpu_custom_call.1} parent=39 // pred_region
          %249 = dma.done [#allocation6], 6144
        $region52: #{tpu_custom_call.1} parent=39 // pred_fallthru
          _
        %s250 = sand.u32 %s31, 1
        %s251 = scalar_lea.sflag [#allocation3], %s250
        %s252 = sand.u32 %s31, 1
        %s253 = smul.addr %s252, 16
        %s254 = scalar_lea.vmem [#allocation2], %s253
        %p255 = pneg %p44
        %p256 = pneg %p41
        %p257 = pneg %p65
        %p258 = pneg %p62
        %p259 = pneg %p86
        %p260 = pneg %p83
        %p261 = pneg %p107
        %p262 = pneg %p104
        %p263 = pneg %p128
        %p264 = pneg %p125
        %p265 = pneg %p154
        %p266 = pneg %p151
        %s267 = sand.u32 %s141, 1
        %s268 = scalar_lea.sflag [#allocation4], %s267
        %s269 = sand.u32 %s141, 1
        %s270 = smul.addr %s269, 16
        %s271 = scalar_lea.vmem [#allocation8], %s270
        %v272 = vld [vmem:[%s237] sm:$0xff]
        %v273 = vld [vmem:[%s237 + $0x8] sm:$0xff]
        %v274 = vlaneseq
        %v275 = vshrl.u32 %v274, 7
        %v276 = vadd.s32 %v275, 8
        %v277 = vadd.s32 %v275, 16
        %v278 = vadd.s32 %v275, 24
        %v279 = vlaneseq
        %v280 = vand.u32 %v279, 127
        %vm281 = vcmp.lt.s32.totalorder %v275, 16
        %vm282 = vcmp.lt.s32.totalorder %v276, 16
        %vm283 = vcmp.lt.s32.totalorder %v277, 16
        %vm284 = vcmp.lt.s32.totalorder %v278, 16
        %v285 = vsub.s32 %v275, 1
        %v286 = vsub.s32 %v276, 1
        %v287 = vsub.s32 %v277, 1
        %v288 = vsub.s32 %v278, 1
        %v289 = vsub.s32 %v275, 16
        %v290 = vsub.s32 %v276, 16
        %v291 = vsub.s32 %v278, 16
        %v292 = vadd.s32 %v289, 1
        %v293 = vadd.s32 %v290, 1
        %v294 = vadd.s32 %v275, 1
        %v295 = vadd.s32 %v291, 1
        %v296 = vsel %vm281, %v285, %v292
        %v297 = vsel %vm282, %v286, %v293
        %v298 = vsel %vm283, %v287, %v294
        %v299 = vsel %vm284, %v288, %v295
        %vm300 = vcmp.eq.s32.totalorder %v280, %v296
        %vm301 = vcmp.eq.s32.totalorder %v280, %v297
        %vm302 = vcmp.eq.s32.totalorder %v280, %v298
        %vm303 = vcmp.eq.s32.totalorder %v280, %v299
        %v304 = vsel %vm300, 1, 0
        %v305 = vsel %vm301, 1, 0
        %v306 = vsel %vm302, 1, 0
        %v307 = vsel %vm303, 1, 0
        %v308 = vcvt.s32.f32 %v304
        %v309 = vcvt.s32.f32 %v305
        %v310 = vcvt.s32.f32 %v306
        %v311 = vcvt.s32.f32 %v307
        %v312 = vld [vmem:[#allocation5] sm:$0xff]
        %v313 = vld [vmem:[#allocation5 + $0x8] sm:$0xff]
        %v314 = vld [vmem:[#allocation5 + $0x10] sm:$0xff]
        %v315 = vld [vmem:[#allocation5 + $0x18] sm:$0xff]
        %v316 = vld [vmem:[#allocation5 + $0x20] sm:$0xff]
        %v317 = vld [vmem:[#allocation5 + $0x28] sm:$0xff]
        %v318 = vld [vmem:[#allocation5 + $0x30] sm:$0xff]
        %v319 = vld [vmem:[#allocation5 + $0x38] sm:$0xff]
        %v320 = vld [vmem:[#allocation5 + $0x40] sm:$0xff]
        %v321 = vld [vmem:[#allocation5 + $0x48] sm:$0xff]
        %v322 = vld [vmem:[#allocation5 + $0x50] sm:$0xff]
        %v323 = vld [vmem:[#allocation5 + $0x58] sm:$0xff]
        %v324 = vld [vmem:[#allocation5 + $0x60] sm:$0xff]
        %v325 = vld [vmem:[#allocation5 + $0x68] sm:$0xff]
        %v326 = vld [vmem:[#allocation5 + $0x70] sm:$0xff]
        %v327 = vld [vmem:[#allocation5 + $0x78] sm:$0xff]
        %v328 = vld [vmem:[#allocation5 + $0x80] sm:$0xff]
        %v329 = vld [vmem:[#allocation5 + $0x88] sm:$0xff]
        %v330 = vld [vmem:[#allocation5 + $0x90] sm:$0xff]
        %v331 = vld [vmem:[#allocation5 + $0x98] sm:$0xff]
        %v332 = vld [vmem:[#allocation5 + $0xa0] sm:$0xff]
        %v333 = vld [vmem:[#allocation5 + $0xa8] sm:$0xff]
        %v334 = vld [vmem:[#allocation5 + $0xb0] sm:$0xff]
        %v335 = vld [vmem:[#allocation5 + $0xb8] sm:$0xff]
        %v336 = vld [vmem:[#allocation5 + $0xc0] sm:$0xff]
        %v337 = vld [vmem:[#allocation5 + $0xc8] sm:$0xff]
        %v338 = vld [vmem:[#allocation5 + $0xd0] sm:$0xff]
        %v339 = vld [vmem:[#allocation5 + $0xd8] sm:$0xff]
        %v340 = vld [vmem:[#allocation5 + $0xe0] sm:$0xff]
        %v341 = vld [vmem:[#allocation5 + $0xe8] sm:$0xff]
        %v342 = vld [vmem:[#allocation5 + $0xf0] sm:$0xff]
        %v343 = vld [vmem:[#allocation5 + $0xf8] sm:$0xff]
        %v344 = vld [vmem:[#allocation5 + $0x100] sm:$0xff]
        %v345 = vld [vmem:[#allocation5 + $0x108] sm:$0xff]
        %v346 = vld [vmem:[#allocation5 + $0x110] sm:$0xff]
        %v347 = vld [vmem:[#allocation5 + $0x118] sm:$0xff]
        %v348 = vld [vmem:[#allocation5 + $0x120] sm:$0xff]
        %v349 = vld [vmem:[#allocation5 + $0x128] sm:$0xff]
        %v350 = vld [vmem:[#allocation5 + $0x130] sm:$0xff]
        %v351 = vld [vmem:[#allocation5 + $0x138] sm:$0xff]
        %v352 = vld [vmem:[#allocation5 + $0x140] sm:$0xff]
        %v353 = vld [vmem:[#allocation5 + $0x148] sm:$0xff]
        %v354 = vld [vmem:[#allocation5 + $0x150] sm:$0xff]
        %v355 = vld [vmem:[#allocation5 + $0x158] sm:$0xff]
        %v356 = vld [vmem:[#allocation5 + $0x160] sm:$0xff]
        %v357 = vld [vmem:[#allocation5 + $0x168] sm:$0xff]
        %v358 = vld [vmem:[#allocation5 + $0x170] sm:$0xff]
        %v359 = vld [vmem:[#allocation5 + $0x178] sm:$0xff]
        %vm360 = vcmask 130048
        %v362 = vsel %vm360, %v308, 0
        %v365 = vsel %vm360, %v309, 0
        %v368 = vsel %vm360, %v310, 0
        %v371 = vsel %vm360, %v311, 0
        %373 = vmatprep.subr.mxu0 0.0
        %374 = vmatpush1.msra.mxu0 %v272
        %375 = vmatprep.subr.mxu0 0.0
        %376 = vmatpush1.msra.mxu0 %v273
        %377 = vmatprep.subr.mxu0 0.0
        %378 = vmatpush1.msra.mxu0 0.0
        %379 = vmatprep.subr.mxu0 0.0
        %380 = vmatpush1.msra.mxu0 0.0
        %381 = vmatprep.subr.mxu0 0.0
        %382 = vmatpush1.msra.mxu0 0.0
        %383 = vmatprep.subr.mxu0 0.0
        %384 = vmatpush1.msra.mxu0 0.0
        %385 = vmatprep.subr.mxu0 0.0
        %386 = vmatpush1.msra.mxu0 0.0
        %387 = vmatprep.subr.mxu0 0.0
        %388 = vmatpush1.msra.mxu0 0.0
        %389 = vmatprep.subr.mxu0 0.0
        %390 = vmatpush1.msra.mxu0 0.0
        %391 = vmatprep.subr.mxu0 0.0
        %392 = vmatpush1.msra.mxu0 0.0
        %393 = vmatprep.subr.mxu0 0.0
        %394 = vmatpush1.msra.mxu0 0.0
        %395 = vmatprep.subr.mxu0 0.0
        %396 = vmatpush1.msra.mxu0 0.0
        %397 = vmatprep.subr.mxu0 0.0
        %398 = vmatpush1.msra.mxu0 0.0
        %399 = vmatprep.subr.mxu0 0.0
        %400 = vmatpush1.msra.mxu0 0.0
        %401 = vmatprep.subr.mxu0 0.0
        %402 = vmatpush1.msra.mxu0 0.0
        %403 = vmatprep.subr.mxu0 0.0
        %404 = vmatpush1.msra.mxu0 0.0
        %405 = vmatprep.subr.mxu0 0.0
        %406 = vmatpush1.msra.mxu0 0.0
        %407 = vmatprep.subr.mxu0 0.0
        %408 = vmatpush1.msra.mxu0 0.0
        %409 = vmatprep.subr.mxu0 0.0
        %410 = vmatpush1.msra.mxu0 0.0
        %411 = vmatprep.subr.mxu0 0.0
        %412 = vmatpush1.msra.mxu0 0.0
        %413 = vmatprep.subr.mxu0 0.0
        %414 = vmatpush1.msra.mxu0 0.0
        %415 = vmatprep.subr.mxu0 0.0
        %416 = vmatpush1.msra.mxu0 0.0
        %417 = vmatprep.subr.mxu0 0.0
        %418 = vmatpush1.msra.mxu0 0.0
        %419 = vmatprep.subr.mxu0 0.0
        %420 = vmatpush1.msra.mxu0 0.0
        %421 = vmatprep.subr.mxu0 0.0
        %422 = vmatpush1.msra.mxu0 0.0
        %423 = vmatprep.subr.mxu0 0.0
        %424 = vmatpush1.msra.mxu0 0.0
        %425 = vmatprep.subr.mxu0 0.0
        %426 = vmatpush1.msra.mxu0 0.0
        %427 = vmatprep.subr.mxu0 0.0
        %428 = vmatpush1.msra.mxu0 0.0
        %429 = vmatprep.subr.mxu0 0.0
        %430 = vmatpush1.msra.mxu0 0.0
        %431 = vmatprep.subr.mxu0 0.0
        %432 = vmatpush1.msra.mxu0 0.0
        %433 = vmatprep.subr.mxu0 0.0
        %434 = vmatpush1.msra.mxu0 0.0
        %435 = vmatprep.subr.mxu0 0.0
        %436 = vmatpush1.msra.mxu0 0.0
        %437 = vmatprep.mubr.f32.mxu0 0.0
        %438 = vmatmul.mubr.f32.gmra.mrb[0].mxu0 %v362
        %v439 = vpop.f32.mrb[0].mxu0
        %v440 = vadd.f32 0.0, %v439
        %v441 = vpop.f32.mrb[0].mxu0
        %442 = vmatprep.mubr.f32.mxu0 0.0
        %443 = vmatmul.mubr.f32.gmra.mrb[0].mxu0 %v365
        %v444 = vpop.f32.mrb[0].mxu0
        %v445 = vadd.f32 0.0, %v444
        %v446 = vpop.f32.mrb[0].mxu0
        %447 = vmatprep.mubr.f32.mxu0 0.0
        %448 = vmatmul.mubr.f32.gmra.mrb[0].mxu0 %v368
        %v449 = vpop.f32.mrb[0].mxu0
        %v450 = vadd.f32 0.0, %v449
        %v451 = vpop.f32.mrb[0].mxu0
        %452 = vmatprep.mubr.f32.mxu0 0.0
        %453 = vmatmul.mubr.f32.gmra.mrb[0].mxu0 %v371
        %v454 = vpop.f32.mrb[0].mxu0
        %v455 = vadd.f32 0.0, %v454
        %v456 = vpop.f32.mrb[0].mxu0
        %457 = vdwg.mxu0
        %v458 = vld [vmem:[%s3] sm:$0x1]
        %v460 = vlaneseq
        %v461 = vshrl.u32 %v460, 7
        %v462 = vsub.s32 0, %v461
        %v463 = vrot.slane %v458, %v462
        %465 = vmatprep.subr.mxu0 0.0
        %466 = vmatpush1.msra.mxu0 %v312
        %467 = vmatprep.subr.mxu0 0.0
        %468 = vmatpush1.msra.mxu0 %v313
        %469 = vmatprep.subr.mxu0 0.0
        %470 = vmatpush1.msra.mxu0 %v314
        %471 = vmatprep.subr.mxu0 0.0
        %472 = vmatpush1.msra.mxu0 %v315
        %473 = vmatprep.subr.mxu0 0.0
        %474 = vmatpush1.msra.mxu0 %v316
        %475 = vmatprep.subr.mxu0 0.0
        %476 = vmatpush1.msra.mxu0 %v317
        %477 = vmatprep.subr.mxu0 0.0
        %478 = vmatpush1.msra.mxu0 %v318
        %479 = vmatprep.subr.mxu0 0.0
        %480 = vmatpush1.msra.mxu0 %v319
        %481 = vmatprep.subr.mxu0 0.0
        %482 = vmatpush1.msra.mxu0 %v320
        %483 = vmatprep.subr.mxu0 0.0
        %484 = vmatpush1.msra.mxu0 %v321
        %485 = vmatprep.subr.mxu0 0.0
        %486 = vmatpush1.msra.mxu0 %v322
        %487 = vmatprep.subr.mxu0 0.0
        %488 = vmatpush1.msra.mxu0 %v323
        %489 = vmatprep.subr.mxu0 0.0
        %490 = vmatpush1.msra.mxu0 %v324
        %491 = vmatprep.subr.mxu0 0.0
        %492 = vmatpush1.msra.mxu0 %v325
        %493 = vmatprep.subr.mxu0 0.0
        %494 = vmatpush1.msra.mxu0 %v326
        %495 = vmatprep.subr.mxu0 0.0
        %496 = vmatpush1.msra.mxu0 %v327
        %497 = vmatprep.subr.mxu0 0.0
        %498 = vmatpush1.msra.mxu0 %v328
        %499 = vmatprep.subr.mxu0 0.0
        %500 = vmatpush1.msra.mxu0 %v329
        %501 = vmatprep.subr.mxu0 0.0
        %502 = vmatpush1.msra.mxu0 %v330
        %503 = vmatprep.subr.mxu0 0.0
        %504 = vmatpush1.msra.mxu0 %v331
        %505 = vmatprep.subr.mxu0 0.0
        %506 = vmatpush1.msra.mxu0 %v332
        %507 = vmatprep.subr.mxu0 0.0
        %508 = vmatpush1.msra.mxu0 %v333
        %509 = vmatprep.subr.mxu0 0.0
        %510 = vmatpush1.msra.mxu0 %v334
        %511 = vmatprep.subr.mxu0 0.0
        %512 = vmatpush1.msra.mxu0 %v335
        %513 = vmatprep.subr.mxu0 0.0
        %514 = vmatpush1.msra.mxu0 %v336
        %515 = vmatprep.subr.mxu0 0.0
        %516 = vmatpush1.msra.mxu0 %v337
        %517 = vmatprep.subr.mxu0 0.0
        %518 = vmatpush1.msra.mxu0 %v338
        %519 = vmatprep.subr.mxu0 0.0
        %520 = vmatpush1.msra.mxu0 %v339
        %521 = vmatprep.subr.mxu0 0.0
        %522 = vmatpush1.msra.mxu0 %v340
        %523 = vmatprep.subr.mxu0 0.0
        %524 = vmatpush1.msra.mxu0 %v341
        %525 = vmatprep.subr.mxu0 0.0
        %526 = vmatpush1.msra.mxu0 %v342
        %527 = vmatprep.subr.mxu0 0.0
        %528 = vmatpush1.msra.mxu0 %v343
        %529 = vmatprep.mubr.f32.mxu0 %v272
        %530 = vmatmul.mubr.f32.gmra.mrb[0].mxu0 %v440
        %v531 = vpop.f32.mrb[0].mxu0
        %v532 = vadd.f32 %v463, %v531
        %v533 = vpop.f32.mrb[0].mxu0
        %534 = vmatprep.mubr.f32.mxu0 %v273
        %535 = vmatmul.mubr.f32.gmra.mrb[0].mxu0 %v445
        %v536 = vpop.f32.mrb[0].mxu0
        %v537 = vadd.f32 %v463, %v536
        %v538 = vpop.f32.mrb[0].mxu0
        %539 = vdwg.mxu0
        %540 = vmatprep.subr.mxu0 0.0
        %541 = vmatpush1.msra.mxu0 %v344
        %542 = vmatprep.subr.mxu0 0.0
        %543 = vmatpush1.msra.mxu0 %v345
        %544 = vmatprep.subr.mxu0 0.0
        %545 = vmatpush1.msra.mxu0 %v346
        %546 = vmatprep.subr.mxu0 0.0
        %547 = vmatpush1.msra.mxu0 %v347
        %548 = vmatprep.subr.mxu0 0.0
        %549 = vmatpush1.msra.mxu0 %v348
        %550 = vmatprep.subr.mxu0 0.0
        %551 = vmatpush1.msra.mxu0 %v349
        %552 = vmatprep.subr.mxu0 0.0
        %553 = vmatpush1.msra.mxu0 %v350
        %554 = vmatprep.subr.mxu0 0.0
        %555 = vmatpush1.msra.mxu0 %v351
        %556 = vmatprep.subr.mxu0 0.0
        %557 = vmatpush1.msra.mxu0 %v352
        %558 = vmatprep.subr.mxu0 0.0
        %559 = vmatpush1.msra.mxu0 %v353
        %560 = vmatprep.subr.mxu0 0.0
        %561 = vmatpush1.msra.mxu0 %v354
        %562 = vmatprep.subr.mxu0 0.0
        %563 = vmatpush1.msra.mxu0 %v355
        %564 = vmatprep.subr.mxu0 0.0
        %565 = vmatpush1.msra.mxu0 %v356
        %566 = vmatprep.subr.mxu0 0.0
        %567 = vmatpush1.msra.mxu0 %v357
        %568 = vmatprep.subr.mxu0 0.0
        %569 = vmatpush1.msra.mxu0 %v358
        %570 = vmatprep.subr.mxu0 0.0
        %571 = vmatpush1.msra.mxu0 %v359
        %572 = vmatprep.subr.mxu0 0.0
        %573 = vmatpush1.msra.mxu0 0.0
        %574 = vmatprep.subr.mxu0 0.0
        %575 = vmatpush1.msra.mxu0 0.0
        %576 = vmatprep.subr.mxu0 0.0
        %577 = vmatpush1.msra.mxu0 0.0
        %578 = vmatprep.subr.mxu0 0.0
        %579 = vmatpush1.msra.mxu0 0.0
        %580 = vmatprep.subr.mxu0 0.0
        %581 = vmatpush1.msra.mxu0 0.0
        %582 = vmatprep.subr.mxu0 0.0
        %583 = vmatpush1.msra.mxu0 0.0
        %584 = vmatprep.subr.mxu0 0.0
        %585 = vmatpush1.msra.mxu0 0.0
        %586 = vmatprep.subr.mxu0 0.0
        %587 = vmatpush1.msra.mxu0 0.0
        %588 = vmatprep.subr.mxu0 0.0
        %589 = vmatpush1.msra.mxu0 0.0
        %590 = vmatprep.subr.mxu0 0.0
        %591 = vmatpush1.msra.mxu0 0.0
        %592 = vmatprep.subr.mxu0 0.0
        %593 = vmatpush1.msra.mxu0 0.0
        %594 = vmatprep.subr.mxu0 0.0
        %595 = vmatpush1.msra.mxu0 0.0
        %596 = vmatprep.subr.mxu0 0.0
        %597 = vmatpush1.msra.mxu0 0.0
        %598 = vmatprep.subr.mxu0 0.0
        %599 = vmatpush1.msra.mxu0 0.0
        %600 = vmatprep.subr.mxu0 0.0
        %601 = vmatpush1.msra.mxu0 0.0
        %602 = vmatprep.subr.mxu0 0.0
        %603 = vmatpush1.msra.mxu0 0.0
        %604 = vmatprep.mubr.f32.mxu0 0.0
        %605 = vmatmul.mubr.f32.gmra.mrb[0].mxu0 %v450
        %v606 = vpop.f32.mrb[0].mxu0
        %v607 = vadd.f32 %v532, %v606
        %v608 = vpop.f32.mrb[0].mxu0
        %609 = vmatprep.mubr.f32.mxu0 0.0
        %610 = vmatmul.mubr.f32.gmra.mrb[0].mxu0 %v455
        %v611 = vpop.f32.mrb[0].mxu0
        %v612 = vadd.f32 %v537, %v611
        %v613 = vpop.f32.mrb[0].mxu0
        %614 = vdwg.mxu0
        %v615 = vmax.f32 %v607, 0.0
        %v616 = vmax.f32 %v612, 0.0
        %v617 = vld [vmem:[#allocation7] sm:$0xff]
        %v618 = vld [vmem:[#allocation7 + $0x8] sm:$0xff]
        %v619 = vld [vmem:[#allocation7 + $0x10] sm:$0xff]
        %v620 = vld [vmem:[#allocation7 + $0x18] sm:$0xff]
        %v621 = vld [vmem:[#allocation7 + $0x20] sm:$0xff]
        %v622 = vld [vmem:[#allocation7 + $0x28] sm:$0xff]
        %v623 = vld [vmem:[#allocation7 + $0x30] sm:$0xff]
        %v624 = vld [vmem:[#allocation7 + $0x38] sm:$0xff]
        %v625 = vld [vmem:[#allocation7 + $0x40] sm:$0xff]
        %v626 = vld [vmem:[#allocation7 + $0x48] sm:$0xff]
        %v627 = vld [vmem:[#allocation7 + $0x50] sm:$0xff]
        %v628 = vld [vmem:[#allocation7 + $0x58] sm:$0xff]
        %v629 = vld [vmem:[#allocation7 + $0x60] sm:$0xff]
        %v630 = vld [vmem:[#allocation7 + $0x68] sm:$0xff]
        %v631 = vld [vmem:[#allocation7 + $0x70] sm:$0xff]
        %v632 = vld [vmem:[#allocation7 + $0x78] sm:$0xff]
        %v633 = vld [vmem:[#allocation7 + $0x80] sm:$0xff]
        %v634 = vld [vmem:[#allocation7 + $0x88] sm:$0xff]
        %v635 = vld [vmem:[#allocation7 + $0x90] sm:$0xff]
        %v636 = vld [vmem:[#allocation7 + $0x98] sm:$0xff]
        %v637 = vld [vmem:[#allocation7 + $0xa0] sm:$0xff]
        %v638 = vld [vmem:[#allocation7 + $0xa8] sm:$0xff]
        %v639 = vld [vmem:[#allocation7 + $0xb0] sm:$0xff]
        %v640 = vld [vmem:[#allocation7 + $0xb8] sm:$0xff]
        %v641 = vld [vmem:[#allocation7 + $0xc0] sm:$0xff]
        %v642 = vld [vmem:[#allocation7 + $0xc8] sm:$0xff]
        %v643 = vld [vmem:[#allocation7 + $0xd0] sm:$0xff]
        %v644 = vld [vmem:[#allocation7 + $0xd8] sm:$0xff]
        %v645 = vld [vmem:[#allocation7 + $0xe0] sm:$0xff]
        %v646 = vld [vmem:[#allocation7 + $0xe8] sm:$0xff]
        %v647 = vld [vmem:[#allocation7 + $0xf0] sm:$0xff]
        %v648 = vld [vmem:[#allocation7 + $0xf8] sm:$0xff]
        %v649 = vld [vmem:[#allocation7 + $0x100] sm:$0xff]
        %v650 = vld [vmem:[#allocation7 + $0x108] sm:$0xff]
        %v651 = vld [vmem:[#allocation7 + $0x110] sm:$0xff]
        %v652 = vld [vmem:[#allocation7 + $0x118] sm:$0xff]
        %v653 = vld [vmem:[#allocation7 + $0x120] sm:$0xff]
        %v654 = vld [vmem:[#allocation7 + $0x128] sm:$0xff]
        %v655 = vld [vmem:[#allocation7 + $0x130] sm:$0xff]
        %v656 = vld [vmem:[#allocation7 + $0x138] sm:$0xff]
        %v657 = vld [vmem:[#allocation7 + $0x140] sm:$0xff]
        %v658 = vld [vmem:[#allocation7 + $0x148] sm:$0xff]
        %v659 = vld [vmem:[#allocation7 + $0x150] sm:$0xff]
        %v660 = vld [vmem:[#allocation7 + $0x158] sm:$0xff]
        %v661 = vld [vmem:[#allocation7 + $0x160] sm:$0xff]
        %v662 = vld [vmem:[#allocation7 + $0x168] sm:$0xff]
        %v663 = vld [vmem:[#allocation7 + $0x170] sm:$0xff]
        %v664 = vld [vmem:[#allocation7 + $0x178] sm:$0xff]
        %665 = vmatprep.subr.mxu0 0.0
        %666 = vmatpush1.msra.mxu0 %v615
        %667 = vmatprep.subr.mxu0 0.0
        %668 = vmatpush1.msra.mxu0 %v616
        %669 = vmatprep.subr.mxu0 0.0
        %670 = vmatpush1.msra.mxu0 0.0
        %671 = vmatprep.subr.mxu0 0.0
        %672 = vmatpush1.msra.mxu0 0.0
        %673 = vmatprep.subr.mxu0 0.0
        %674 = vmatpush1.msra.mxu0 0.0
        %675 = vmatprep.subr.mxu0 0.0
        %676 = vmatpush1.msra.mxu0 0.0
        %677 = vmatprep.subr.mxu0 0.0
        %678 = vmatpush1.msra.mxu0 0.0
        %679 = vmatprep.subr.mxu0 0.0
        %680 = vmatpush1.msra.mxu0 0.0
        %681 = vmatprep.subr.mxu0 0.0
        %682 = vmatpush1.msra.mxu0 0.0
        %683 = vmatprep.subr.mxu0 0.0
        %684 = vmatpush1.msra.mxu0 0.0
        %685 = vmatprep.subr.mxu0 0.0
        %686 = vmatpush1.msra.mxu0 0.0
        %687 = vmatprep.subr.mxu0 0.0
        %688 = vmatpush1.msra.mxu0 0.0
        %689 = vmatprep.subr.mxu0 0.0
        %690 = vmatpush1.msra.mxu0 0.0
        %691 = vmatprep.subr.mxu0 0.0
        %692 = vmatpush1.msra.mxu0 0.0
        %693 = vmatprep.subr.mxu0 0.0
        %694 = vmatpush1.msra.mxu0 0.0
        %695 = vmatprep.subr.mxu0 0.0
        %696 = vmatpush1.msra.mxu0 0.0
        %697 = vmatprep.subr.mxu0 0.0
        %698 = vmatpush1.msra.mxu0 0.0
        %699 = vmatprep.subr.mxu0 0.0
        %700 = vmatpush1.msra.mxu0 0.0
        %701 = vmatprep.subr.mxu0 0.0
        %702 = vmatpush1.msra.mxu0 0.0
        %703 = vmatprep.subr.mxu0 0.0
        %704 = vmatpush1.msra.mxu0 0.0
        %705 = vmatprep.subr.mxu0 0.0
        %706 = vmatpush1.msra.mxu0 0.0
        %707 = vmatprep.subr.mxu0 0.0
        %708 = vmatpush1.msra.mxu0 0.0
        %709 = vmatprep.subr.mxu0 0.0
        %710 = vmatpush1.msra.mxu0 0.0
        %711 = vmatprep.subr.mxu0 0.0
        %712 = vmatpush1.msra.mxu0 0.0
        %713 = vmatprep.subr.mxu0 0.0
        %714 = vmatpush1.msra.mxu0 0.0
        %715 = vmatprep.subr.mxu0 0.0
        %716 = vmatpush1.msra.mxu0 0.0
        %717 = vmatprep.subr.mxu0 0.0
        %718 = vmatpush1.msra.mxu0 0.0
        %719 = vmatprep.subr.mxu0 0.0
        %720 = vmatpush1.msra.mxu0 0.0
        %721 = vmatprep.subr.mxu0 0.0
        %722 = vmatpush1.msra.mxu0 0.0
        %723 = vmatprep.subr.mxu0 0.0
        %724 = vmatpush1.msra.mxu0 0.0
        %725 = vmatprep.subr.mxu0 0.0
        %726 = vmatpush1.msra.mxu0 0.0
        %727 = vmatprep.subr.mxu0 0.0
        %728 = vmatpush1.msra.mxu0 0.0
        %729 = vmatprep.mubr.f32.mxu0 0.0
        %730 = vmatmul.mubr.f32.gmra.mrb[0].mxu0 %v362
        %v731 = vpop.f32.mrb[0].mxu0
        %v732 = vadd.f32 0.0, %v731
        %v733 = vpop.f32.mrb[0].mxu0
        %734 = vmatprep.mubr.f32.mxu0 0.0
        %735 = vmatmul.mubr.f32.gmra.mrb[0].mxu0 %v365
        %v736 = vpop.f32.mrb[0].mxu0
        %v737 = vadd.f32 0.0, %v736
        %v738 = vpop.f32.mrb[0].mxu0
        %739 = vmatprep.mubr.f32.mxu0 0.0
        %740 = vmatmul.mubr.f32.gmra.mrb[0].mxu0 %v368
        %v741 = vpop.f32.mrb[0].mxu0
        %v742 = vadd.f32 0.0, %v741
        %v743 = vpop.f32.mrb[0].mxu0
        %744 = vmatprep.mubr.f32.mxu0 0.0
        %745 = vmatmul.mubr.f32.gmra.mrb[0].mxu0 %v371
        %v746 = vpop.f32.mrb[0].mxu0
        %v747 = vadd.f32 0.0, %v746
        %v748 = vpop.f32.mrb[0].mxu0
        %749 = vdwg.mxu0
        %v750 = vld [vmem:[%s4] sm:$0x1]
        %v752 = vlaneseq
        %v753 = vshrl.u32 %v752, 7
        %v754 = vsub.s32 0, %v753
        %v755 = vrot.slane %v750, %v754
        %757 = vmatprep.subr.mxu0 0.0
        %758 = vmatpush1.msra.mxu0 %v617
        %759 = vmatprep.subr.mxu0 0.0
        %760 = vmatpush1.msra.mxu0 %v618
        %761 = vmatprep.subr.mxu0 0.0
        %762 = vmatpush1.msra.mxu0 %v619
        %763 = vmatprep.subr.mxu0 0.0
        %764 = vmatpush1.msra.mxu0 %v620
        %765 = vmatprep.subr.mxu0 0.0
        %766 = vmatpush1.msra.mxu0 %v621
        %767 = vmatprep.subr.mxu0 0.0
        %768 = vmatpush1.msra.mxu0 %v622
        %769 = vmatprep.subr.mxu0 0.0
        %770 = vmatpush1.msra.mxu0 %v623
        %771 = vmatprep.subr.mxu0 0.0
        %772 = vmatpush1.msra.mxu0 %v624
        %773 = vmatprep.subr.mxu0 0.0
        %774 = vmatpush1.msra.mxu0 %v625
        %775 = vmatprep.subr.mxu0 0.0
        %776 = vmatpush1.msra.mxu0 %v626
        %777 = vmatprep.subr.mxu0 0.0
        %778 = vmatpush1.msra.mxu0 %v627
        %779 = vmatprep.subr.mxu0 0.0
        %780 = vmatpush1.msra.mxu0 %v628
        %781 = vmatprep.subr.mxu0 0.0
        %782 = vmatpush1.msra.mxu0 %v629
        %783 = vmatprep.subr.mxu0 0.0
        %784 = vmatpush1.msra.mxu0 %v630
        %785 = vmatprep.subr.mxu0 0.0
        %786 = vmatpush1.msra.mxu0 %v631
        %787 = vmatprep.subr.mxu0 0.0
        %788 = vmatpush1.msra.mxu0 %v632
        %789 = vmatprep.subr.mxu0 0.0
        %790 = vmatpush1.msra.mxu0 %v633
        %791 = vmatprep.subr.mxu0 0.0
        %792 = vmatpush1.msra.mxu0 %v634
        %793 = vmatprep.subr.mxu0 0.0
        %794 = vmatpush1.msra.mxu0 %v635
        %795 = vmatprep.subr.mxu0 0.0
        %796 = vmatpush1.msra.mxu0 %v636
        %797 = vmatprep.subr.mxu0 0.0
        %798 = vmatpush1.msra.mxu0 %v637
        %799 = vmatprep.subr.mxu0 0.0
        %800 = vmatpush1.msra.mxu0 %v638
        %801 = vmatprep.subr.mxu0 0.0
        %802 = vmatpush1.msra.mxu0 %v639
        %803 = vmatprep.subr.mxu0 0.0
        %804 = vmatpush1.msra.mxu0 %v640
        %805 = vmatprep.subr.mxu0 0.0
        %806 = vmatpush1.msra.mxu0 %v641
        %807 = vmatprep.subr.mxu0 0.0
        %808 = vmatpush1.msra.mxu0 %v642
        %809 = vmatprep.subr.mxu0 0.0
        %810 = vmatpush1.msra.mxu0 %v643
        %811 = vmatprep.subr.mxu0 0.0
        %812 = vmatpush1.msra.mxu0 %v644
        %813 = vmatprep.subr.mxu0 0.0
        %814 = vmatpush1.msra.mxu0 %v645
        %815 = vmatprep.subr.mxu0 0.0
        %816 = vmatpush1.msra.mxu0 %v646
        %817 = vmatprep.subr.mxu0 0.0
        %818 = vmatpush1.msra.mxu0 %v647
        %819 = vmatprep.subr.mxu0 0.0
        %820 = vmatpush1.msra.mxu0 %v648
        %821 = vmatprep.mubr.f32.mxu0 %v615
        %822 = vmatmul.mubr.f32.gmra.mrb[0].mxu0 %v732
        %v823 = vpop.f32.mrb[0].mxu0
        %v824 = vadd.f32 %v755, %v823
        %v825 = vpop.f32.mrb[0].mxu0
        %826 = vmatprep.mubr.f32.mxu0 %v616
        %827 = vmatmul.mubr.f32.gmra.mrb[0].mxu0 %v737
        %v828 = vpop.f32.mrb[0].mxu0
        %v829 = vadd.f32 %v755, %v828
        %v830 = vpop.f32.mrb[0].mxu0
        %831 = vdwg.mxu0
        %832 = vmatprep.subr.mxu0 0.0
        %833 = vmatpush1.msra.mxu0 %v649
        %834 = vmatprep.subr.mxu0 0.0
        %835 = vmatpush1.msra.mxu0 %v650
        %836 = vmatprep.subr.mxu0 0.0
        %837 = vmatpush1.msra.mxu0 %v651
        %838 = vmatprep.subr.mxu0 0.0
        %839 = vmatpush1.msra.mxu0 %v652
        %840 = vmatprep.subr.mxu0 0.0
        %841 = vmatpush1.msra.mxu0 %v653
        %842 = vmatprep.subr.mxu0 0.0
        %843 = vmatpush1.msra.mxu0 %v654
        %844 = vmatprep.subr.mxu0 0.0
        %845 = vmatpush1.msra.mxu0 %v655
        %846 = vmatprep.subr.mxu0 0.0
        %847 = vmatpush1.msra.mxu0 %v656
        %848 = vmatprep.subr.mxu0 0.0
        %849 = vmatpush1.msra.mxu0 %v657
        %850 = vmatprep.subr.mxu0 0.0
        %851 = vmatpush1.msra.mxu0 %v658
        %852 = vmatprep.subr.mxu0 0.0
        %853 = vmatpush1.msra.mxu0 %v659
        %854 = vmatprep.subr.mxu0 0.0
        %855 = vmatpush1.msra.mxu0 %v660
        %856 = vmatprep.subr.mxu0 0.0
        %857 = vmatpush1.msra.mxu0 %v661
        %858 = vmatprep.subr.mxu0 0.0
        %859 = vmatpush1.msra.mxu0 %v662
        %860 = vmatprep.subr.mxu0 0.0
        %861 = vmatpush1.msra.mxu0 %v663
        %862 = vmatprep.subr.mxu0 0.0
        %863 = vmatpush1.msra.mxu0 %v664
        %864 = vmatprep.subr.mxu0 0.0
        %865 = vmatpush1.msra.mxu0 0.0
        %866 = vmatprep.subr.mxu0 0.0
        %867 = vmatpush1.msra.mxu0 0.0
        %868 = vmatprep.subr.mxu0 0.0
        %869 = vmatpush1.msra.mxu0 0.0
        %870 = vmatprep.subr.mxu0 0.0
        %871 = vmatpush1.msra.mxu0 0.0
        %872 = vmatprep.subr.mxu0 0.0
        %873 = vmatpush1.msra.mxu0 0.0
        %874 = vmatprep.subr.mxu0 0.0
        %875 = vmatpush1.msra.mxu0 0.0
        %876 = vmatprep.subr.mxu0 0.0
        %877 = vmatpush1.msra.mxu0 0.0
        %878 = vmatprep.subr.mxu0 0.0
        %879 = vmatpush1.msra.mxu0 0.0
        %880 = vmatprep.subr.mxu0 0.0
        %881 = vmatpush1.msra.mxu0 0.0
        %882 = vmatprep.subr.mxu0 0.0
        %883 = vmatpush1.msra.mxu0 0.0
        %884 = vmatprep.subr.mxu0 0.0
        %885 = vmatpush1.msra.mxu0 0.0
        %886 = vmatprep.subr.mxu0 0.0
        %887 = vmatpush1.msra.mxu0 0.0
        %888 = vmatprep.subr.mxu0 0.0
        %889 = vmatpush1.msra.mxu0 0.0
        %890 = vmatprep.subr.mxu0 0.0
        %891 = vmatpush1.msra.mxu0 0.0
        %892 = vmatprep.subr.mxu0 0.0
        %893 = vmatpush1.msra.mxu0 0.0
        %894 = vmatprep.subr.mxu0 0.0
        %895 = vmatpush1.msra.mxu0 0.0
        %896 = vmatprep.mubr.f32.mxu0 0.0
        %897 = vmatmul.mubr.f32.gmra.mrb[0].mxu0 %v742
        %v898 = vpop.f32.mrb[0].mxu0
        %v899 = vadd.f32 %v824, %v898
        %v900 = vpop.f32.mrb[0].mxu0
        %901 = vmatprep.mubr.f32.mxu0 0.0
        %902 = vmatmul.mubr.f32.gmra.mrb[0].mxu0 %v747
        %v903 = vpop.f32.mrb[0].mxu0
        %v904 = vadd.f32 %v829, %v903
        %v905 = vpop.f32.mrb[0].mxu0
        %906 = vdwg.mxu0
        %v907 = vadd.f32 %v272, %v899
        %v908 = vadd.f32 %v273, %v904
        %v909 = vmax.f32 %v907, 0.0
        %v910 = vmax.f32 %v908, 0.0
        %911 = vst [vmem:[%s271] sm:$0xff] %v909
        %912 = vst [vmem:[%s271 + $0x8] sm:$0xff] %v910
        %s913 = sand.u32 %s141, 1
        %s914 = scalar_lea.sflag [#allocation4], %s913
        %s915 = sand.u32 %s141, 1
        %s916 = smul.addr %s915, 16
        %s917 = scalar_lea.vmem [#allocation8], %s916
        // Predicated region
        $region53: #{tpu_custom_call.1} parent=39 // pred_check
          %p918 = pneg %p151
        $region54: #{tpu_custom_call.1} parent=39 // pred_check_branch
          %920 = sbr.rel (%p918) target = $region56
        $region55: #{tpu_custom_call.1} parent=39 // pred_region
          %s922 = ssub.s32 256, 256
          %923 = vsyncadd %s914, %s922
          %s924 = smul.addr %s23, 2
          %s925 = smul.addr %s924, 128
          %s926 = scalar_lea.hbm %s5, %s925
          %s927 = sshll.u32 %s917, 4
          %s928 = int_to_ptr.vmem [resolvable:$true] %s927
          %933 = dma.vmem_to_hbm [thread:$0]  %s928, 256, %s926, %s914, 128, 128, 8
        $region56: #{tpu_custom_call.1} parent=39 // pred_fallthru
          _
      $region40: #{tpu_custom_call.1} parent=5 // pred_fallthru
        _
      %p934 = scmp.le.s32.totalorder 2, %s18
      // Predicated region
      $region57: #{tpu_custom_call.1} parent=5 // pred_check
        %p935 = pneg %p934
      $region58: #{tpu_custom_call.1} parent=5 // pred_check_branch
        %937 = sbr.rel (%p935) target = $region60
      $region59: #{tpu_custom_call.1} parent=5 // pred_region
        %s938 = ssub.s32 %s18, 2
        // Predicated region
        $region61: #{tpu_custom_call.1} parent=59 // pred_check
          %p939 = pneg %p157
        $region62: #{tpu_custom_call.1} parent=59 // pred_check_branch
          %941 = sbr.rel (%p939) target = $region64
        $region63: #{tpu_custom_call.1} parent=59 // pred_region
          %s942 = sand.u32 %s142, 1
          %s943 = scalar_lea.sflag [#allocation4], %s942
          %s944 = sand.u32 %s142, 1
          %s945 = smul.addr %s944, 16
          %s946 = scalar_lea.vmem [#allocation8], %s945
          %947 = dma.done %s943, 256
        $region64: #{tpu_custom_call.1} parent=59 // pred_fallthru
          _
      $region60: #{tpu_custom_call.1} parent=5 // pred_fallthru
        _
    $region6: #{tpu_custom_call.1} parent=1 // loop_footer
      %s22 = sadd.s32 1, %s18
    $region7: #{tpu_custom_call.1} parent=1 // loop_footer_branch
      %17 = sbr.rel target = $region3
    $region8: #{tpu_custom_call.1} parent=1 // loop_exit
      _
    %948 = vsyncpa [#allocation3], 1
    %s949 = scalar_lea.sflag [#allocation3], 1
    %950 = vsyncpa %s949, 1
    %951 = vsyncpa [#allocation6], 1
    %952 = vsyncpa [#allocation4], 1
    %s953 = scalar_lea.sflag [#allocation4], 1
    %954 = vsyncpa %s953, 1

</llo_original>
